<compile_context>
chip_gen: v7x
topology: tpu7x:2x2x1
jax: 0.10.0
libtpu: 0.0.40
codegen_flags: <defaults>
</compile_context>

<pallas_src>
import math

import jax
import jax.numpy as jnp
from jax.experimental import pallas as pl
from jax.experimental.pallas import tpu as pltpu


def _make_pos_embedding(emb_size: int, maxlen: int = 5000) -> jnp.ndarray:
    """Deterministic sinusoidal table, identical to the PyTorch __init__."""
    den = jnp.exp(-jnp.arange(0, emb_size, 2, dtype=jnp.float32)
                  * math.log(10000.0) / emb_size)               # (emb/2,)
    pos = jnp.arange(0, maxlen, dtype=jnp.float32)[:, None]      # (maxlen, 1)
    pe = jnp.zeros((maxlen, emb_size), dtype=jnp.float32)
    pe = pe.at[:, 0::2].set(jnp.sin(pos * den))
    pe = pe.at[:, 1::2].set(jnp.cos(pos * den))
    return pe


def _pos_enc_kernel(x_ref, pe_ref, o_ref):
    # x_ref: (b, tS, E) block; pe_ref: (tS, E) block.  Add in the (promoted)
    # output dtype -- a no-op cast when everything is already that dtype.
    dt = o_ref.dtype
    o_ref[...] = x_ref[...].astype(dt) + pe_ref[...].astype(dt)[None, :, :]


def _fit_rows(bytes_per_seq_row: int, budget_bytes: int,
              row_mult: int, seq_len: int) -> int:
    """Largest seq-tile (rows) whose double-buffered footprint fits budget."""
    rows = budget_bytes // (2 * max(bytes_per_seq_row, 1))   # x2: double buffer
    if rows >= seq_len:
        return seq_len                     # full-dim block is always legal
    rows = (rows // row_mult) * row_mult   # sublane-aligned tile
    return max(rows, row_mult)


def positional_encoding(token_embedding: jnp.ndarray,
                        pos_embedding: jnp.ndarray,
                        *,
                        vmem_tile_budget_bytes: int = 24 << 20,
                        vmem_limit_bytes: int = 48 << 20) -> jnp.ndarray:
    """token_embedding: (B, S, E); pos_embedding: (maxlen, E)."""
    B, S, E = token_embedding.shape
    maxlen, E_pe = pos_embedding.shape
    assert E_pe == E, "embedding size mismatch"
    assert S <= maxlen, (
        f"sequence length {S} exceeds positional table maxlen {maxlen}")

    out_dtype = jnp.promote_types(token_embedding.dtype, pos_embedding.dtype)
    x_item = jnp.dtype(token_embedding.dtype).itemsize
    pe_item = jnp.dtype(pos_embedding.dtype).itemsize
    out_item = jnp.dtype(out_dtype).itemsize

    # Sublane alignment on the seq (second-to-last) axis: 8 rows for 32-bit,
    # 16 for bf16, 32 for int8 (use the strictest among the arrays involved).
    min_item = min(x_item, pe_item, out_item)
    row_mult = 8 * max(1, 4 // min_item)

    # True per-seq-row VMEM cost (x tile + pe tile + out tile).
    row_split = E * (x_item + pe_item + out_item)            # one batch element
    row_folded = E * (B * (x_item + out_item) + pe_item)     # whole batch folded

    ts_folded = _fit_rows(row_folded, vmem_tile_budget_bytes, row_mult, S)
    fold_batch = ts_folded >= min(S, 256)   # fold when B is small enough

    if fold_batch:
        ts = ts_folded
        grid = (pl.cdiv(S, ts),)
        x_spec = pl.BlockSpec((B, ts, E), lambda s: (0, s, 0))
        pe_spec = pl.BlockSpec((ts, E), lambda s: (s, 0))
        out_spec = pl.BlockSpec((B, ts, E), lambda s: (0, s, 0))
        semantics = ("parallel",)
    else:
        ts = _fit_rows(row_split, vmem_tile_budget_bytes, row_mult, S)
        grid = (pl.cdiv(S, ts), B)          # b innermost -> pe tile resident
        x_spec = pl.BlockSpec((1, ts, E), lambda s, b: (b, s, 0))
        pe_spec = pl.BlockSpec((ts, E), lambda s, b: (s, 0))
        out_spec = pl.BlockSpec((1, ts, E), lambda s, b: (b, s, 0))
        semantics = ("parallel", "arbitrary")

    # Tiling corner case: if the pe block spans the whole (unaligned) S but
    # pe's first dim is maxlen != S, take the tiny (S, E) slice so the block
    # equals the array's full dims (keeps the (8,128)/full-dim rule happy).
    pe = pos_embedding
    if ts == S and (S % row_mult) != 0 and maxlen != S:
        pe = pos_embedding[:S, :]

    return pl.pallas_call(
        _pos_enc_kernel,
        out_shape=jax.ShapeDtypeStruct((B, S, E), out_dtype),
        grid_spec=pl.GridSpec(
            grid=grid,
            in_specs=[x_spec, pe_spec],
            out_specs=out_spec,
        ),
        compiler_params=pltpu.CompilerParams(
            dimension_semantics=semantics,
            vmem_limit_bytes=vmem_limit_bytes),
    )(token_embedding, pe)


if __name__ == "__main__":
    root = jax.random.PRNGKey(0)
    k1, k2, k3 = jax.random.split(root, 3)
    maxlen = 64

    # --- Test 1: small f32 case (batch folded into the block, 1 grid step).
    B, S, E = 2, 8, 32
    pe = _make_pos_embedding(E, maxlen)
    x = jax.random.normal(k1, (B, S, E), dtype=jnp.float32)
    out = jax.block_until_ready(positional_encoding(x, pe))
    ref = x + pe[:S][None, :, :]
    assert out.shape == ref.shape and out.dtype == ref.dtype
    assert jnp.allclose(out, ref, atol=1e-6), "test1 mismatch vs reference"

    # --- Test 2: ragged seq length (S not a multiple of the tile) exercising
    # the masked last tile and the per-batch grid path -- no wrapper padding.
    B2, S2, E2 = 2, 20, 32
    pe2 = _make_pos_embedding(E2, maxlen)
    x2 = jax.random.normal(k2, (B2, S2, E2), dtype=jnp.float32)
    out2 = jax.block_until_ready(
        positional_encoding(x2, pe2, vmem_tile_budget_bytes=1))  # force ts=8
    ref2 = x2 + pe2[:S2][None, :, :]
    assert jnp.allclose(out2, ref2, atol=1e-6), "test2 mismatch vs reference"

    # --- Test 3: bf16 input, torch-style promotion to f32 output.
    x3 = jax.random.normal(k3, (B, S, E), dtype=jnp.bfloat16)
    out3 = jax.block_until_ready(positional_encoding(x3, pe))
    ref3 = x3.astype(jnp.float32) + pe[:S][None, :, :]
    assert out3.dtype == jnp.float32
    assert jnp.allclose(out3, ref3, atol=1e-6), "test3 mismatch vs reference"

    print("KERNEL_OK")
</pallas_src>

<mosaic_0001>
module attributes {stable_mosaic.version = 11 : i64} {
  func.func @_pos_enc_kernel(%arg0: i32, %arg1: memref<2x8x32xf32, #tpu.memory_space<vmem>>, %arg2: memref<8x32xf32, #tpu.memory_space<vmem>>, %arg3: memref<2x8x32xf32, #tpu.memory_space<vmem>>) attributes {dimension_semantics = [#tpu.dimension_semantics<parallel>], iteration_bounds = array<i64: 1>, scalar_prefetch = 0 : i64, scratch_operands = 0 : i64, tpu.core_type = #tpu.core_type<tc>, window_params = [{transform_indices = @transform_0, window_bounds = array<i64: 2, 8, 32>}, {transform_indices = @transform_1, window_bounds = array<i64: 8, 32>}, {transform_indices = @transform_2, window_bounds = array<i64: 2, 8, 32>}]} {
    %c0 = arith.constant 0 : index
    %c0_0 = arith.constant 0 : index
    %c0_1 = arith.constant 0 : index
    %0 = vector.load %arg1[%c0, %c0_0, %c0_1] : memref<2x8x32xf32, #tpu.memory_space<vmem>>, vector<2x8x32xf32>
    %c0_2 = arith.constant 0 : index
    %c0_3 = arith.constant 0 : index
    %1 = vector.load %arg2[%c0_2, %c0_3] : memref<8x32xf32, #tpu.memory_space<vmem>>, vector<8x32xf32>
    %2 = vector.shape_cast %1 : vector<8x32xf32> to vector<1x8x32xf32>
    %3 = vector.broadcast %2 : vector<1x8x32xf32> to vector<2x8x32xf32>
    %4 = arith.addf %0, %3 : vector<2x8x32xf32>
    %c0_4 = arith.constant 0 : index
    %c0_5 = arith.constant 0 : index
    %c0_6 = arith.constant 0 : index
    %5 = vector.load %arg3[%c0_4, %c0_5, %c0_6] : memref<2x8x32xf32, #tpu.memory_space<vmem>>, vector<2x8x32xf32>
    tpu.vector_store %arg3[%c0_4, %c0_5, %c0_6], %4 {strides = array<i32>} : memref<2x8x32xf32, #tpu.memory_space<vmem>>, vector<2x8x32xf32>,
    return
  }
  func.func @transform_0(%arg0: i32) -> (i32, i32, i32) {
    %c0_i32 = arith.constant 0 : i32
    %c0_i32_0 = arith.constant 0 : i32
    %c0_i32_1 = arith.constant 0 : i32
    return %c0_i32, %arg0, %c0_i32_0 : i32, i32, i32
  }
  func.func @transform_1(%arg0: i32) -> (i32, i32) {
    %c0_i32 = arith.constant 0 : i32
    %c0_i32_0 = arith.constant 0 : i32
    return %arg0, %c0_i32 : i32, i32
  }
  func.func @transform_2(%arg0: i32) -> (i32, i32, i32) {
    %c0_i32 = arith.constant 0 : i32
    %c0_i32_0 = arith.constant 0 : i32
    %c0_i32_1 = arith.constant 0 : i32
    return %c0_i32, %arg0, %c0_i32_0 : i32, i32, i32
  }
}

</mosaic_0001>

<llo_original>
// kernel: tpu_custom_call.1
$region0: #{tpu_custom_call.1}
  #allocation0 [shape = 'u32[]', space=smem, size = 0x4, offset = 0x4, fixed_abs, tag = 'smem constant byte address 0x4 - core index']
  #allocation1 [shape = 'u32[144,128]{1,0:T(1,128)}', space=vmem, size = 0x12000, scoped, tag = 'internal scratch']
  %s0 = inlined_call_operand.vmem [shape: f32[2,8,32], index: 0, kind: input, shape index: {}]
  %s1 = inlined_call_operand.vmem [shape: f32[64,32], index: 1, kind: input, shape index: {}]
  %s2 = inlined_call_operand.hbm [shape: f32[2,8,32], index: 2, kind: output, shape index: {}]
  %s3 = sld [smem:[#allocation0]]
  $region18: #{tpu_custom_call.1} parent=0
    _
  %s5 = ssub.s32 1, %s3
  %s6 = scalar_select 0, %s5, %s3
  $region1: #{tpu_custom_call.1} parent=0
    #allocation2 [shape = 'u8[8192]{0}', space=vmem, size = 0x2000, scoped, tag = 'output window, operand 0, single buffered']
    #allocation3 [shape = 's32[1]{0}', space=sflag, size = 0x4, scoped, tag = 'scoped memory for tpu_custom_call.1']
    %7 = vsyncpa [#allocation3], 0
    // Predicated region
    $region2: #{tpu_custom_call.1} parent=1 // pred_check
      _
    $region3: #{tpu_custom_call.1} parent=1 // pred_check_branch
      %9 = sbr.rel (0) target = $region5
    $region4: #{tpu_custom_call.1} parent=1 // pred_region
      _
    $region5: #{tpu_custom_call.1} parent=1 // pred_fallthru
      _
    // Predicated region
    $region6: #{tpu_custom_call.1} parent=1 // pred_check
      _
    $region7: #{tpu_custom_call.1} parent=1 // pred_check_branch
      %11 = sbr.rel (0) target = $region9
    $region8: #{tpu_custom_call.1} parent=1 // pred_region
      _
    $region9: #{tpu_custom_call.1} parent=1 // pred_fallthru
      _
    %v12 = vld [vmem:[%s0] sm:$0xff]
    %v13 = vld [vmem:[%s0 + $0x8] sm:$0xff]
    %v14 = vld [vmem:[%s1] sm:$0xff]
    %v15 = vadd.f32 %v12, %v14
    %v16 = vadd.f32 %v13, %v14
    %vm17 = vcmask 261120
    %18 = vst.msk [vmem:[#allocation2] sm:$0xff] %vm17, %v15
    %19 = vst.msk [vmem:[#allocation2 + $0x8] sm:$0xff] %vm17, %v16
    // Predicated region
    $region10: #{tpu_custom_call.1} parent=1 // pred_check
      _
    $region11: #{tpu_custom_call.1} parent=1 // pred_check_branch
      %21 = sbr.rel (0) target = $region13
    $region12: #{tpu_custom_call.1} parent=1 // pred_region
      %s23 = ssub.s32 256, 256
      %24 = vsyncadd [#allocation3], %s23
      %s25 = sshll.u32 [#allocation2], 4
      %s26 = int_to_ptr.vmem [resolvable:$true] %s25
      %31 = dma.vmem_to_hbm [thread:$0]  %s26, 256, %s2, [#allocation3], 128, 128, 8
    $region13: #{tpu_custom_call.1} parent=1 // pred_fallthru
      _
    // Predicated region
    $region14: #{tpu_custom_call.1} parent=1 // pred_check
      _
    $region15: #{tpu_custom_call.1} parent=1 // pred_check_branch
      %33 = sbr.rel (0) target = $region17
    $region16: #{tpu_custom_call.1} parent=1 // pred_region
      %34 = dma.done [#allocation3], 256
    $region17: #{tpu_custom_call.1} parent=1 // pred_fallthru
      _
    %35 = vsyncpa [#allocation3], 1

</llo_original>
